<compile_context>
chip_gen: v5e
topology: v5e:2x2
jax: 0.10.0
libtpu: 0.0.40
codegen_flags: <defaults>
</compile_context>

<pallas_src>
import math

import jax
import jax.numpy as jnp
from jax.experimental import pallas as pl
from jax.experimental.pallas import tpu as pltpu


# ----------------------------- configuration -------------------------------
HIDDEN = 32          # hidden_size
NUM_HEADS = 4        # num_heads
ATT_SIZE = HIDDEN // NUM_HEADS
ATTN_BIAS_DIM = 6    # attn_bias_dim
SEQ = 8              # sequence length
BATCH = 2
GROUPS = BATCH * NUM_HEADS        # g = b * NUM_HEADS + h
SCALE = ATT_SIZE ** (-0.5)


# ------------------------------- Pallas kernel -----------------------------
def _mha_kernel(x_ref, w_ref, b_ref, wo_ref, bo_ref, bias_ref, out_ref):
    # x_ref:    (3, B*S, H)     stacked [q; k; v] activations (rows = (b, s))
    # w_ref:    (12, H, dk)     per-head projection weights, i = c*nh + h,
    #                           c in {q, k, v}; attention scale folded into q
    # b_ref:    (12, 1, dk)     matching per-head biases (scale folded into q)
    # wo_ref:   (H, H)          output-projection weight
    # bo_ref:   (1, H)          output-projection bias
    # bias_ref: (B*nh, S, S)    projected attention bias, g = b*nh + h
    # out_ref:  (B*S, H)

    def project(c):
        x2d = x_ref[c]                                           # (B*S, H)
        heads = []
        for h in range(NUM_HEADS):
            i = c * NUM_HEADS + h
            y = jnp.dot(x2d, w_ref[i],
                        preferred_element_type=jnp.float32) + b_ref[i]  # (B*S, dk)
            # Split (B*S, dk) -> (B, S, dk): sublane-tile split, no relayout.
            heads.append(y.reshape(BATCH, SEQ, ATT_SIZE))
        # (B, nh, S, dk) -> (B*nh, S, dk): major-axis stack + major merge only.
        return jnp.stack(heads, axis=1).reshape(GROUPS, SEQ, ATT_SIZE)

    qg = project(0)                  # scale already folded into Wq / bq
    kg = project(1)
    vg = project(2)

    # All (batch, head) groups in one batched contraction — no cross-batch
    # score entries, so no -1e30 masking and no O(B^2) packed score tensor.
    scores = jnp.einsum('gsd,gtd->gst', qg, kg,
                        preferred_element_type=jnp.float32)      # (B*nh, S, S)
    scores = scores + bias_ref[...]

    # Softmax over keys (dim=3 in the PyTorch module), kept in f32.
    m = jnp.max(scores, axis=-1, keepdims=True)
    e = jnp.exp(scores - m)
    denom = jnp.sum(e, axis=-1, keepdims=True)
    inv = pl.reciprocal(denom, approx=True)          # EUP slot
    inv = inv * (2.0 - denom * inv)                  # one NR step -> ~f32 accurate
    p = e * inv
    # TODO(synk): attention dropout omitted (eval / inference semantics).

    ctx = jnp.einsum('gst,gtd->gsd', p, vg,
                     preferred_element_type=jnp.float32)         # (B*nh, S, dk)

    # Merge heads back into lanes (lane-concat of head contexts) and run ONE
    # (B*S, H) @ (H, H) output-projection push.
    rows = []
    for b in range(BATCH):
        rows.append(jnp.concatenate(
            [ctx[b * NUM_HEADS + h] for h in range(NUM_HEADS)], axis=-1))  # (S, H)
    ctx2 = jnp.concatenate(rows, axis=0)                                   # (B*S, H)

    out = jnp.dot(ctx2, wo_ref[...],
                  preferred_element_type=jnp.float32) + bo_ref[...]
    out_ref[...] = out.astype(out_ref.dtype)


# --------------------------- parameter packing ------------------------------
def pack_params(params):
    """One-time parameter packing; kept out of the per-call path."""
    wq_t, bq, wk_t, bk, wv_t, bv, wb_t, bb, wo_t, bo = params

    def per_head_w(w_t):                 # (H, H) -> (nh, H, dk)
        return jnp.transpose(w_t.reshape(HIDDEN, NUM_HEADS, ATT_SIZE), (1, 0, 2))

    def per_head_b(b):                   # (1, H) -> (nh, 1, dk)
        return b.reshape(NUM_HEADS, 1, ATT_SIZE)

    # Fold the attention scale into the Q projection (exact up to f32 rounding).
    w_pack = jnp.concatenate(
        [per_head_w(wq_t * SCALE), per_head_w(wk_t), per_head_w(wv_t)],
        axis=0)                                                   # (12, H, dk)
    b_pack = jnp.concatenate(
        [per_head_b(bq * SCALE), per_head_b(bk), per_head_b(bv)],
        axis=0)                                                   # (12, 1, dk)
    return w_pack, b_pack, wo_t, bo, wb_t, bb


# --------------------------------- wrapper ----------------------------------
@jax.jit
def mha_forward(q, k, v, attn_bias, packed):
    w_pack, b_pack, wo_t, bo, wb_t, bb = packed
    B, S, H = q.shape

    x = jnp.stack([q.reshape(B * S, H),
                   k.reshape(B * S, H),
                   v.reshape(B * S, H)], axis=0)                  # (3, B*S, H)

    # attn_bias Linear hoisted out of the kernel (fused into the jitted graph);
    # laid out per (batch, head) group — half the bytes of the old masked form.
    bias_p = attn_bias @ wb_t + bb                                # (B, S, S, nh)
    bias_g = jnp.transpose(bias_p, (0, 3, 1, 2)).reshape(B * NUM_HEADS, S, S)

    out2d = pl.pallas_call(
        _mha_kernel,
        out_shape=jax.ShapeDtypeStruct((B * S, H), q.dtype),
        in_specs=[pl.BlockSpec(memory_space=pltpu.MemorySpace.VMEM)
                  for _ in range(6)],
        out_specs=pl.BlockSpec(memory_space=pltpu.MemorySpace.VMEM),
    )(x, w_pack, b_pack, wo_t, bo, bias_g)

    return out2d.reshape(B, S, H)


# ----------------------------- pure-JAX reference ---------------------------
def mha_reference(q, k, v, attn_bias, params):
    wq_t, bq, wk_t, bk, wv_t, bv, wb_t, bb, wo_t, bo = params
    B, S, H = q.shape
    dk = ATT_SIZE
    nh = NUM_HEADS

    Q = q @ wq_t + bq
    K = k @ wk_t + bk
    V = v @ wv_t + bv

    Q = Q.reshape(B, S, nh, dk).transpose(0, 2, 1, 3) * SCALE   # (B, nh, S, dk)
    K = K.reshape(B, S, nh, dk).transpose(0, 2, 3, 1)           # (B, nh, dk, S)
    V = V.reshape(B, S, nh, dk).transpose(0, 2, 1, 3)           # (B, nh, S, dk)

    scores = jnp.einsum("bhsd,bhdt->bhst", Q, K)
    bias = (attn_bias @ wb_t + bb).transpose(0, 3, 1, 2)        # (B, nh, S, S)
    scores = scores + bias
    p = jax.nn.softmax(scores, axis=-1)
    ctx = jnp.einsum("bhst,bhtd->bhsd", p, V)
    ctx = ctx.transpose(0, 2, 1, 3).reshape(B, S, H)
    return ctx @ wo_t + bo


# ----------------------------------- main ------------------------------------
def _init_params(key):
    # Deterministic synthetic parameters (PyTorch Linear default-ish init).
    ks = jax.random.split(key, 10)

    def lin(kw, kb, fan_in, fan_out):
        bound = 1.0 / math.sqrt(fan_in)
        w = jax.random.uniform(kw, (fan_out, fan_in), jnp.float32, -bound, bound)
        b = jax.random.uniform(kb, (1, fan_out), jnp.float32, -bound, bound)
        return w.T, b   # pre-transposed to [in, out]

    wq_t, bq = lin(ks[0], ks[1], HIDDEN, HIDDEN)
    wk_t, bk = lin(ks[2], ks[3], HIDDEN, HIDDEN)
    wv_t, bv = lin(ks[4], ks[5], HIDDEN, HIDDEN)
    wb_t, bb = lin(ks[6], ks[7], ATTN_BIAS_DIM, NUM_HEADS)
    wo_t, bo = lin(ks[8], ks[9], HIDDEN, HIDDEN)
    return (wq_t, bq, wk_t, bk, wv_t, bv, wb_t, bb, wo_t, bo)


if __name__ == "__main__":
    key = jax.random.PRNGKey(0)
    k_in, k_par = jax.random.split(key)
    kq, kk, kv, kab = jax.random.split(k_in, 4)

    q = jax.random.normal(kq, (BATCH, SEQ, HIDDEN), jnp.float32)
    k = jax.random.normal(kk, (BATCH, SEQ, HIDDEN), jnp.float32)
    v = jax.random.normal(kv, (BATCH, SEQ, HIDDEN), jnp.float32)
    attn_bias = jax.random.normal(kab, (BATCH, SEQ, SEQ, ATTN_BIAS_DIM),
                                  jnp.float32)

    params = _init_params(k_par)
    packed = pack_params(params)        # one-time packing, outside the jit call path

    out = mha_forward(q, k, v, attn_bias, packed)
    out = jax.block_until_ready(out)

    ref = mha_reference(q, k, v, attn_bias, params)
    assert out.shape == (BATCH, SEQ, HIDDEN)
    # Tolerance covers the approx-reciprocal + Newton-step softmax and the
    # scale-folded / re-associated (but order-preserving) contractions.
    assert jnp.allclose(out, ref, atol=5e-4, rtol=5e-4)

    print("KERNEL_OK")
</pallas_src>

<mosaic_0001>
module attributes {stable_mosaic.version = 11 : i64} {
  func.func @_mha_kernel(%arg0: memref<3x16x32xf32, #tpu.memory_space<vmem>>, %arg1: memref<12x32x8xf32, #tpu.memory_space<vmem>>, %arg2: memref<12x1x8xf32, #tpu.memory_space<vmem>>, %arg3: memref<32x32xf32, #tpu.memory_space<vmem>>, %arg4: memref<1x32xf32, #tpu.memory_space<vmem>>, %arg5: memref<8x8x8xf32, #tpu.memory_space<vmem>>, %arg6: memref<16x32xf32, #tpu.memory_space<vmem>>) attributes {dimension_semantics = [], scalar_prefetch = 0 : i64, scratch_operands = 0 : i64, tpu.core_type = #tpu.core_type<tc>} {
    %c0 = arith.constant 0 : index
    %c0_0 = arith.constant 0 : index
    %c0_1 = arith.constant 0 : index
    %0 = vector.load %arg0[%c0, %c0_0, %c0_1] : memref<3x16x32xf32, #tpu.memory_space<vmem>>, vector<1x16x32xf32>
    %1 = vector.shape_cast %0 : vector<1x16x32xf32> to vector<16x32xf32>
    %c0_2 = arith.constant 0 : index
    %c0_3 = arith.constant 0 : index
    %c0_4 = arith.constant 0 : index
    %2 = vector.load %arg1[%c0_2, %c0_3, %c0_4] : memref<12x32x8xf32, #tpu.memory_space<vmem>>, vector<1x32x8xf32>
    %3 = vector.shape_cast %2 : vector<1x32x8xf32> to vector<32x8xf32>
    %cst = arith.constant dense<0.000000e+00> : vector<16x8xf32>
    %4 = tpu.matmul %1, %3, %cst {dimension_numbers = #tpu.dot_dimension_numbers<[1], [0], [0], [1], [0, 0, 1, 1], [], []>} : vector<16x32xf32>, vector<32x8xf32>, vector<16x8xf32> -> vector<16x8xf32>
    %c0_5 = arith.constant 0 : index
    %c0_6 = arith.constant 0 : index
    %c0_7 = arith.constant 0 : index
    %5 = vector.load %arg2[%c0_5, %c0_6, %c0_7] : memref<12x1x8xf32, #tpu.memory_space<vmem>>, vector<1x1x8xf32>
    %6 = vector.shape_cast %5 : vector<1x1x8xf32> to vector<1x8xf32>
    %7 = vector.broadcast %6 : vector<1x8xf32> to vector<16x8xf32>
    %8 = arith.addf %4, %7 : vector<16x8xf32>
    %9 = vector.shape_cast %8 : vector<16x8xf32> to vector<2x8x8xf32>
    %c1 = arith.constant 1 : index
    %c0_8 = arith.constant 0 : index
    %c0_9 = arith.constant 0 : index
    %10 = vector.load %arg1[%c1, %c0_8, %c0_9] : memref<12x32x8xf32, #tpu.memory_space<vmem>>, vector<1x32x8xf32>
    %11 = vector.shape_cast %10 : vector<1x32x8xf32> to vector<32x8xf32>
    %cst_10 = arith.constant dense<0.000000e+00> : vector<16x8xf32>
    %12 = tpu.matmul %1, %11, %cst_10 {dimension_numbers = #tpu.dot_dimension_numbers<[1], [0], [0], [1], [0, 0, 1, 1], [], []>} : vector<16x32xf32>, vector<32x8xf32>, vector<16x8xf32> -> vector<16x8xf32>
    %c1_11 = arith.constant 1 : index
    %c0_12 = arith.constant 0 : index
    %c0_13 = arith.constant 0 : index
    %13 = vector.load %arg2[%c1_11, %c0_12, %c0_13] : memref<12x1x8xf32, #tpu.memory_space<vmem>>, vector<1x1x8xf32>
    %14 = vector.shape_cast %13 : vector<1x1x8xf32> to vector<1x8xf32>
    %15 = vector.broadcast %14 : vector<1x8xf32> to vector<16x8xf32>
    %16 = arith.addf %12, %15 : vector<16x8xf32>
    %17 = vector.shape_cast %16 : vector<16x8xf32> to vector<2x8x8xf32>
    %c2 = arith.constant 2 : index
    %c0_14 = arith.constant 0 : index
    %c0_15 = arith.constant 0 : index
    %18 = vector.load %arg1[%c2, %c0_14, %c0_15] : memref<12x32x8xf32, #tpu.memory_space<vmem>>, vector<1x32x8xf32>
    %19 = vector.shape_cast %18 : vector<1x32x8xf32> to vector<32x8xf32>
    %cst_16 = arith.constant dense<0.000000e+00> : vector<16x8xf32>
    %20 = tpu.matmul %1, %19, %cst_16 {dimension_numbers = #tpu.dot_dimension_numbers<[1], [0], [0], [1], [0, 0, 1, 1], [], []>} : vector<16x32xf32>, vector<32x8xf32>, vector<16x8xf32> -> vector<16x8xf32>
    %c2_17 = arith.constant 2 : index
    %c0_18 = arith.constant 0 : index
    %c0_19 = arith.constant 0 : index
    %21 = vector.load %arg2[%c2_17, %c0_18, %c0_19] : memref<12x1x8xf32, #tpu.memory_space<vmem>>, vector<1x1x8xf32>
    %22 = vector.shape_cast %21 : vector<1x1x8xf32> to vector<1x8xf32>
    %23 = vector.broadcast %22 : vector<1x8xf32> to vector<16x8xf32>
    %24 = arith.addf %20, %23 : vector<16x8xf32>
    %25 = vector.shape_cast %24 : vector<16x8xf32> to vector<2x8x8xf32>
    %c3 = arith.constant 3 : index
    %c0_20 = arith.constant 0 : index
    %c0_21 = arith.constant 0 : index
    %26 = vector.load %arg1[%c3, %c0_20, %c0_21] : memref<12x32x8xf32, #tpu.memory_space<vmem>>, vector<1x32x8xf32>
    %27 = vector.shape_cast %26 : vector<1x32x8xf32> to vector<32x8xf32>
    %cst_22 = arith.constant dense<0.000000e+00> : vector<16x8xf32>
    %28 = tpu.matmul %1, %27, %cst_22 {dimension_numbers = #tpu.dot_dimension_numbers<[1], [0], [0], [1], [0, 0, 1, 1], [], []>} : vector<16x32xf32>, vector<32x8xf32>, vector<16x8xf32> -> vector<16x8xf32>
    %c3_23 = arith.constant 3 : index
    %c0_24 = arith.constant 0 : index
    %c0_25 = arith.constant 0 : index
    %29 = vector.load %arg2[%c3_23, %c0_24, %c0_25] : memref<12x1x8xf32, #tpu.memory_space<vmem>>, vector<1x1x8xf32>
    %30 = vector.shape_cast %29 : vector<1x1x8xf32> to vector<1x8xf32>
    %31 = vector.broadcast %30 : vector<1x8xf32> to vector<16x8xf32>
    %32 = arith.addf %28, %31 : vector<16x8xf32>
    %33 = vector.shape_cast %32 : vector<16x8xf32> to vector<2x8x8xf32>
    %34 = vector.shape_cast %9 : vector<2x8x8xf32> to vector<2x1x8x8xf32>
    %35 = vector.shape_cast %17 : vector<2x8x8xf32> to vector<2x1x8x8xf32>
    %36 = vector.shape_cast %25 : vector<2x8x8xf32> to vector<2x1x8x8xf32>
    %37 = vector.shape_cast %33 : vector<2x8x8xf32> to vector<2x1x8x8xf32>
    %38 = tpu.concatenate %34, %35, %36, %37 in 1 : vector<2x1x8x8xf32>, vector<2x1x8x8xf32>, vector<2x1x8x8xf32>, vector<2x1x8x8xf32> -> vector<2x4x8x8xf32>
    %39 = vector.shape_cast %38 : vector<2x4x8x8xf32> to vector<8x8x8xf32>
    %c1_26 = arith.constant 1 : index
    %c0_27 = arith.constant 0 : index
    %c0_28 = arith.constant 0 : index
    %40 = vector.load %arg0[%c1_26, %c0_27, %c0_28] : memref<3x16x32xf32, #tpu.memory_space<vmem>>, vector<1x16x32xf32>
    %41 = vector.shape_cast %40 : vector<1x16x32xf32> to vector<16x32xf32>
    %c4 = arith.constant 4 : index
    %c0_29 = arith.constant 0 : index
    %c0_30 = arith.constant 0 : index
    %42 = vector.load %arg1[%c4, %c0_29, %c0_30] : memref<12x32x8xf32, #tpu.memory_space<vmem>>, vector<1x32x8xf32>
    %43 = vector.shape_cast %42 : vector<1x32x8xf32> to vector<32x8xf32>
    %cst_31 = arith.constant dense<0.000000e+00> : vector<16x8xf32>
    %44 = tpu.matmul %41, %43, %cst_31 {dimension_numbers = #tpu.dot_dimension_numbers<[1], [0], [0], [1], [0, 0, 1, 1], [], []>} : vector<16x32xf32>, vector<32x8xf32>, vector<16x8xf32> -> vector<16x8xf32>
    %c4_32 = arith.constant 4 : index
    %c0_33 = arith.constant 0 : index
    %c0_34 = arith.constant 0 : index
    %45 = vector.load %arg2[%c4_32, %c0_33, %c0_34] : memref<12x1x8xf32, #tpu.memory_space<vmem>>, vector<1x1x8xf32>
    %46 = vector.shape_cast %45 : vector<1x1x8xf32> to vector<1x8xf32>
    %47 = vector.broadcast %46 : vector<1x8xf32> to vector<16x8xf32>
    %48 = arith.addf %44, %47 : vector<16x8xf32>
    %49 = vector.shape_cast %48 : vector<16x8xf32> to vector<2x8x8xf32>
    %c5 = arith.constant 5 : index
    %c0_35 = arith.constant 0 : index
    %c0_36 = arith.constant 0 : index
    %50 = vector.load %arg1[%c5, %c0_35, %c0_36] : memref<12x32x8xf32, #tpu.memory_space<vmem>>, vector<1x32x8xf32>
    %51 = vector.shape_cast %50 : vector<1x32x8xf32> to vector<32x8xf32>
    %cst_37 = arith.constant dense<0.000000e+00> : vector<16x8xf32>
    %52 = tpu.matmul %41, %51, %cst_37 {dimension_numbers = #tpu.dot_dimension_numbers<[1], [0], [0], [1], [0, 0, 1, 1], [], []>} : vector<16x32xf32>, vector<32x8xf32>, vector<16x8xf32> -> vector<16x8xf32>
    %c5_38 = arith.constant 5 : index
    %c0_39 = arith.constant 0 : index
    %c0_40 = arith.constant 0 : index
    %53 = vector.load %arg2[%c5_38, %c0_39, %c0_40] : memref<12x1x8xf32, #tpu.memory_space<vmem>>, vector<1x1x8xf32>
    %54 = vector.shape_cast %53 : vector<1x1x8xf32> to vector<1x8xf32>
    %55 = vector.broadcast %54 : vector<1x8xf32> to vector<16x8xf32>
    %56 = arith.addf %52, %55 : vector<16x8xf32>
    %57 = vector.shape_cast %56 : vector<16x8xf32> to vector<2x8x8xf32>
    %c6 = arith.constant 6 : index
    %c0_41 = arith.constant 0 : index
    %c0_42 = arith.constant 0 : index
    %58 = vector.load %arg1[%c6, %c0_41, %c0_42] : memref<12x32x8xf32, #tpu.memory_space<vmem>>, vector<1x32x8xf32>
    %59 = vector.shape_cast %58 : vector<1x32x8xf32> to vector<32x8xf32>
    %cst_43 = arith.constant dense<0.000000e+00> : vector<16x8xf32>
    %60 = tpu.matmul %41, %59, %cst_43 {dimension_numbers = #tpu.dot_dimension_numbers<[1], [0], [0], [1], [0, 0, 1, 1], [], []>} : vector<16x32xf32>, vector<32x8xf32>, vector<16x8xf32> -> vector<16x8xf32>
    %c6_44 = arith.constant 6 : index
    %c0_45 = arith.constant 0 : index
    %c0_46 = arith.constant 0 : index
    %61 = vector.load %arg2[%c6_44, %c0_45, %c0_46] : memref<12x1x8xf32, #tpu.memory_space<vmem>>, vector<1x1x8xf32>
    %62 = vector.shape_cast %61 : vector<1x1x8xf32> to vector<1x8xf32>
    %63 = vector.broadcast %62 : vector<1x8xf32> to vector<16x8xf32>
    %64 = arith.addf %60, %63 : vector<16x8xf32>
    %65 = vector.shape_cast %64 : vector<16x8xf32> to vector<2x8x8xf32>
    %c7 = arith.constant 7 : index
    %c0_47 = arith.constant 0 : index
    %c0_48 = arith.constant 0 : index
    %66 = vector.load %arg1[%c7, %c0_47, %c0_48] : memref<12x32x8xf32, #tpu.memory_space<vmem>>, vector<1x32x8xf32>
    %67 = vector.shape_cast %66 : vector<1x32x8xf32> to vector<32x8xf32>
    %cst_49 = arith.constant dense<0.000000e+00> : vector<16x8xf32>
    %68 = tpu.matmul %41, %67, %cst_49 {dimension_numbers = #tpu.dot_dimension_numbers<[1], [0], [0], [1], [0, 0, 1, 1], [], []>} : vector<16x32xf32>, vector<32x8xf32>, vector<16x8xf32> -> vector<16x8xf32>
    %c7_50 = arith.constant 7 : index
    %c0_51 = arith.constant 0 : index
    %c0_52 = arith.constant 0 : index
    %69 = vector.load %arg2[%c7_50, %c0_51, %c0_52] : memref<12x1x8xf32, #tpu.memory_space<vmem>>, vector<1x1x8xf32>
    %70 = vector.shape_cast %69 : vector<1x1x8xf32> to vector<1x8xf32>
    %71 = vector.broadcast %70 : vector<1x8xf32> to vector<16x8xf32>
    %72 = arith.addf %68, %71 : vector<16x8xf32>
    %73 = vector.shape_cast %72 : vector<16x8xf32> to vector<2x8x8xf32>
    %74 = vector.shape_cast %49 : vector<2x8x8xf32> to vector<2x1x8x8xf32>
    %75 = vector.shape_cast %57 : vector<2x8x8xf32> to vector<2x1x8x8xf32>
    %76 = vector.shape_cast %65 : vector<2x8x8xf32> to vector<2x1x8x8xf32>
    %77 = vector.shape_cast %73 : vector<2x8x8xf32> to vector<2x1x8x8xf32>
    %78 = tpu.concatenate %74, %75, %76, %77 in 1 : vector<2x1x8x8xf32>, vector<2x1x8x8xf32>, vector<2x1x8x8xf32>, vector<2x1x8x8xf32> -> vector<2x4x8x8xf32>
    %79 = vector.shape_cast %78 : vector<2x4x8x8xf32> to vector<8x8x8xf32>
    %c2_53 = arith.constant 2 : index
    %c0_54 = arith.constant 0 : index
    %c0_55 = arith.constant 0 : index
    %80 = vector.load %arg0[%c2_53, %c0_54, %c0_55] : memref<3x16x32xf32, #tpu.memory_space<vmem>>, vector<1x16x32xf32>
    %81 = vector.shape_cast %80 : vector<1x16x32xf32> to vector<16x32xf32>
    %c8 = arith.constant 8 : index
    %c0_56 = arith.constant 0 : index
    %c0_57 = arith.constant 0 : index
    %82 = vector.load %arg1[%c8, %c0_56, %c0_57] : memref<12x32x8xf32, #tpu.memory_space<vmem>>, vector<1x32x8xf32>
    %83 = vector.shape_cast %82 : vector<1x32x8xf32> to vector<32x8xf32>
    %cst_58 = arith.constant dense<0.000000e+00> : vector<16x8xf32>
    %84 = tpu.matmul %81, %83, %cst_58 {dimension_numbers = #tpu.dot_dimension_numbers<[1], [0], [0], [1], [0, 0, 1, 1], [], []>} : vector<16x32xf32>, vector<32x8xf32>, vector<16x8xf32> -> vector<16x8xf32>
    %c8_59 = arith.constant 8 : index
    %c0_60 = arith.constant 0 : index
    %c0_61 = arith.constant 0 : index
    %85 = vector.load %arg2[%c8_59, %c0_60, %c0_61] : memref<12x1x8xf32, #tpu.memory_space<vmem>>, vector<1x1x8xf32>
    %86 = vector.shape_cast %85 : vector<1x1x8xf32> to vector<1x8xf32>
    %87 = vector.broadcast %86 : vector<1x8xf32> to vector<16x8xf32>
    %88 = arith.addf %84, %87 : vector<16x8xf32>
    %89 = vector.shape_cast %88 : vector<16x8xf32> to vector<2x8x8xf32>
    %c9 = arith.constant 9 : index
    %c0_62 = arith.constant 0 : index
    %c0_63 = arith.constant 0 : index
    %90 = vector.load %arg1[%c9, %c0_62, %c0_63] : memref<12x32x8xf32, #tpu.memory_space<vmem>>, vector<1x32x8xf32>
    %91 = vector.shape_cast %90 : vector<1x32x8xf32> to vector<32x8xf32>
    %cst_64 = arith.constant dense<0.000000e+00> : vector<16x8xf32>
    %92 = tpu.matmul %81, %91, %cst_64 {dimension_numbers = #tpu.dot_dimension_numbers<[1], [0], [0], [1], [0, 0, 1, 1], [], []>} : vector<16x32xf32>, vector<32x8xf32>, vector<16x8xf32> -> vector<16x8xf32>
    %c9_65 = arith.constant 9 : index
    %c0_66 = arith.constant 0 : index
    %c0_67 = arith.constant 0 : index
    %93 = vector.load %arg2[%c9_65, %c0_66, %c0_67] : memref<12x1x8xf32, #tpu.memory_space<vmem>>, vector<1x1x8xf32>
    %94 = vector.shape_cast %93 : vector<1x1x8xf32> to vector<1x8xf32>
    %95 = vector.broadcast %94 : vector<1x8xf32> to vector<16x8xf32>
    %96 = arith.addf %92, %95 : vector<16x8xf32>
    %97 = vector.shape_cast %96 : vector<16x8xf32> to vector<2x8x8xf32>
    %c10 = arith.constant 10 : index
    %c0_68 = arith.constant 0 : index
    %c0_69 = arith.constant 0 : index
    %98 = vector.load %arg1[%c10, %c0_68, %c0_69] : memref<12x32x8xf32, #tpu.memory_space<vmem>>, vector<1x32x8xf32>
    %99 = vector.shape_cast %98 : vector<1x32x8xf32> to vector<32x8xf32>
    %cst_70 = arith.constant dense<0.000000e+00> : vector<16x8xf32>
    %100 = tpu.matmul %81, %99, %cst_70 {dimension_numbers = #tpu.dot_dimension_numbers<[1], [0], [0], [1], [0, 0, 1, 1], [], []>} : vector<16x32xf32>, vector<32x8xf32>, vector<16x8xf32> -> vector<16x8xf32>
    %c10_71 = arith.constant 10 : index
    %c0_72 = arith.constant 0 : index
    %c0_73 = arith.constant 0 : index
    %101 = vector.load %arg2[%c10_71, %c0_72, %c0_73] : memref<12x1x8xf32, #tpu.memory_space<vmem>>, vector<1x1x8xf32>
    %102 = vector.shape_cast %101 : vector<1x1x8xf32> to vector<1x8xf32>
    %103 = vector.broadcast %102 : vector<1x8xf32> to vector<16x8xf32>
    %104 = arith.addf %100, %103 : vector<16x8xf32>
    %105 = vector.shape_cast %104 : vector<16x8xf32> to vector<2x8x8xf32>
    %c11 = arith.constant 11 : index
    %c0_74 = arith.constant 0 : index
    %c0_75 = arith.constant 0 : index
    %106 = vector.load %arg1[%c11, %c0_74, %c0_75] : memref<12x32x8xf32, #tpu.memory_space<vmem>>, vector<1x32x8xf32>
    %107 = vector.shape_cast %106 : vector<1x32x8xf32> to vector<32x8xf32>
    %cst_76 = arith.constant dense<0.000000e+00> : vector<16x8xf32>
    %108 = tpu.matmul %81, %107, %cst_76 {dimension_numbers = #tpu.dot_dimension_numbers<[1], [0], [0], [1], [0, 0, 1, 1], [], []>} : vector<16x32xf32>, vector<32x8xf32>, vector<16x8xf32> -> vector<16x8xf32>
    %c11_77 = arith.constant 11 : index
    %c0_78 = arith.constant 0 : index
    %c0_79 = arith.constant 0 : index
    %109 = vector.load %arg2[%c11_77, %c0_78, %c0_79] : memref<12x1x8xf32, #tpu.memory_space<vmem>>, vector<1x1x8xf32>
    %110 = vector.shape_cast %109 : vector<1x1x8xf32> to vector<1x8xf32>
    %111 = vector.broadcast %110 : vector<1x8xf32> to vector<16x8xf32>
    %112 = arith.addf %108, %111 : vector<16x8xf32>
    %113 = vector.shape_cast %112 : vector<16x8xf32> to vector<2x8x8xf32>
    %114 = vector.shape_cast %89 : vector<2x8x8xf32> to vector<2x1x8x8xf32>
    %115 = vector.shape_cast %97 : vector<2x8x8xf32> to vector<2x1x8x8xf32>
    %116 = vector.shape_cast %105 : vector<2x8x8xf32> to vector<2x1x8x8xf32>
    %117 = vector.shape_cast %113 : vector<2x8x8xf32> to vector<2x1x8x8xf32>
    %118 = tpu.concatenate %114, %115, %116, %117 in 1 : vector<2x1x8x8xf32>, vector<2x1x8x8xf32>, vector<2x1x8x8xf32>, vector<2x1x8x8xf32> -> vector<2x4x8x8xf32>
    %119 = vector.shape_cast %118 : vector<2x4x8x8xf32> to vector<8x8x8xf32>
    "tpu.trace_start"() <{level = 10 : i32, message = "gsd,gtd->gst"}> : () -> ()
    %cst_80 = arith.constant dense<0.000000e+00> : vector<8x8x8xf32>
    %120 = tpu.matmul %39, %79, %cst_80 {dimension_numbers = #tpu.dot_dimension_numbers<[2], [2], [1], [1], [0, 0, 0, 1, 1, 1], [0], [0]>} : vector<8x8x8xf32>, vector<8x8x8xf32>, vector<8x8x8xf32> -> vector<8x8x8xf32>
    "tpu.trace_stop"() : () -> ()
    %c0_81 = arith.constant 0 : index
    %c0_82 = arith.constant 0 : index
    %c0_83 = arith.constant 0 : index
    %121 = vector.load %arg5[%c0_81, %c0_82, %c0_83] : memref<8x8x8xf32, #tpu.memory_space<vmem>>, vector<8x8x8xf32>
    %122 = arith.addf %120, %121 : vector<8x8x8xf32>
    %cst_84 = arith.constant dense<0xFF800000> : vector<8x8xf32>
    %123 = vector.multi_reduction <maximumf>, %122, %cst_84 [2] : vector<8x8x8xf32> to vector<8x8xf32>
    %124 = vector.shape_cast %123 : vector<8x8xf32> to vector<8x8x1xf32>
    %125 = vector.broadcast %124 : vector<8x8x1xf32> to vector<8x8x8xf32>
    %126 = arith.subf %122, %125 : vector<8x8x8xf32>
    %127 = math.exp %126 : vector<8x8x8xf32>
    %cst_85 = arith.constant dense<0.000000e+00> : vector<8x8xf32>
    %128 = vector.multi_reduction <add>, %127, %cst_85 [2] : vector<8x8x8xf32> to vector<8x8xf32>
    %129 = vector.shape_cast %128 : vector<8x8xf32> to vector<8x8x1xf32>
    %130 = tpu.reciprocal %129 {approx = true} : vector<8x8x1xf32> -> vector<8x8x1xf32>
    %131 = arith.mulf %129, %130 : vector<8x8x1xf32>
    %cst_86 = arith.constant 2.000000e+00 : f32
    %132 = vector.broadcast %cst_86 : f32 to vector<8x8x1xf32>
    %133 = arith.subf %132, %131 : vector<8x8x1xf32>
    %134 = arith.mulf %130, %133 : vector<8x8x1xf32>
    %135 = vector.broadcast %134 : vector<8x8x1xf32> to vector<8x8x8xf32>
    %136 = arith.mulf %127, %135 : vector<8x8x8xf32>
    "tpu.trace_start"() <{level = 10 : i32, message = "gst,gtd->gsd"}> : () -> ()
    %cst_87 = arith.constant dense<0.000000e+00> : vector<8x8x8xf32>
    %137 = tpu.matmul %136, %119, %cst_87 {dimension_numbers = #tpu.dot_dimension_numbers<[2], [1], [1], [2], [0, 0, 0, 1, 1, 2], [0], [0]>} : vector<8x8x8xf32>, vector<8x8x8xf32>, vector<8x8x8xf32> -> vector<8x8x8xf32>
    "tpu.trace_stop"() : () -> ()
    %138 = vector.extract_strided_slice %137 {offsets = [0, 0, 0], sizes = [1, 8, 8], strides = [1, 1, 1]} : vector<8x8x8xf32> to vector<1x8x8xf32>
    %139 = vector.shape_cast %138 : vector<1x8x8xf32> to vector<8x8xf32>
    %140 = vector.extract_strided_slice %137 {offsets = [1, 0, 0], sizes = [1, 8, 8], strides = [1, 1, 1]} : vector<8x8x8xf32> to vector<1x8x8xf32>
    %141 = vector.shape_cast %140 : vector<1x8x8xf32> to vector<8x8xf32>
    %142 = vector.extract_strided_slice %137 {offsets = [2, 0, 0], sizes = [1, 8, 8], strides = [1, 1, 1]} : vector<8x8x8xf32> to vector<1x8x8xf32>
    %143 = vector.shape_cast %142 : vector<1x8x8xf32> to vector<8x8xf32>
    %144 = vector.extract_strided_slice %137 {offsets = [3, 0, 0], sizes = [1, 8, 8], strides = [1, 1, 1]} : vector<8x8x8xf32> to vector<1x8x8xf32>
    %145 = vector.shape_cast %144 : vector<1x8x8xf32> to vector<8x8xf32>
    %146 = tpu.concatenate %139, %141, %143, %145 in 1 : vector<8x8xf32>, vector<8x8xf32>, vector<8x8xf32>, vector<8x8xf32> -> vector<8x32xf32>
    %147 = vector.extract_strided_slice %137 {offsets = [4, 0, 0], sizes = [1, 8, 8], strides = [1, 1, 1]} : vector<8x8x8xf32> to vector<1x8x8xf32>
    %148 = vector.shape_cast %147 : vector<1x8x8xf32> to vector<8x8xf32>
    %149 = vector.extract_strided_slice %137 {offsets = [5, 0, 0], sizes = [1, 8, 8], strides = [1, 1, 1]} : vector<8x8x8xf32> to vector<1x8x8xf32>
    %150 = vector.shape_cast %149 : vector<1x8x8xf32> to vector<8x8xf32>
    %151 = vector.extract_strided_slice %137 {offsets = [6, 0, 0], sizes = [1, 8, 8], strides = [1, 1, 1]} : vector<8x8x8xf32> to vector<1x8x8xf32>
    %152 = vector.shape_cast %151 : vector<1x8x8xf32> to vector<8x8xf32>
    %153 = vector.extract_strided_slice %137 {offsets = [7, 0, 0], sizes = [1, 8, 8], strides = [1, 1, 1]} : vector<8x8x8xf32> to vector<1x8x8xf32>
    %154 = vector.shape_cast %153 : vector<1x8x8xf32> to vector<8x8xf32>
    %155 = tpu.concatenate %148, %150, %152, %154 in 1 : vector<8x8xf32>, vector<8x8xf32>, vector<8x8xf32>, vector<8x8xf32> -> vector<8x32xf32>
    %156 = tpu.concatenate %146, %155 in 0 : vector<8x32xf32>, vector<8x32xf32> -> vector<16x32xf32>
    %c0_88 = arith.constant 0 : index
    %c0_89 = arith.constant 0 : index
    %157 = vector.load %arg3[%c0_88, %c0_89] : memref<32x32xf32, #tpu.memory_space<vmem>>, vector<32x32xf32>
    %cst_90 = arith.constant dense<0.000000e+00> : vector<16x32xf32>
    %158 = tpu.matmul %156, %157, %cst_90 {dimension_numbers = #tpu.dot_dimension_numbers<[1], [0], [0], [1], [0, 0, 1, 1], [], []>} : vector<16x32xf32>, vector<32x32xf32>, vector<16x32xf32> -> vector<16x32xf32>
    %c0_91 = arith.constant 0 : index
    %c0_92 = arith.constant 0 : index
    %159 = vector.load %arg4[%c0_91, %c0_92] : memref<1x32xf32, #tpu.memory_space<vmem>>, vector<1x32xf32>
    %160 = vector.broadcast %159 : vector<1x32xf32> to vector<16x32xf32>
    %161 = arith.addf %158, %160 : vector<16x32xf32>
    %c0_93 = arith.constant 0 : index
    %c0_94 = arith.constant 0 : index
    %162 = vector.load %arg6[%c0_93, %c0_94] : memref<16x32xf32, #tpu.memory_space<vmem>>, vector<16x32xf32>
    tpu.vector_store %arg6[%c0_93, %c0_94], %161 {strides = array<i32>} : memref<16x32xf32, #tpu.memory_space<vmem>>, vector<16x32xf32>,
    return
  }
}

</mosaic_0001>

<llo_original>
// kernel: mha_forward.1
$region0: #{mha_forward.1}
  #allocation0 [shape = 'u32[]', space=smem, size = 0x4, offset = 0x4, fixed_abs, tag = 'smem constant byte address 0x4 - core index']
  #allocation1 [shape = 'u32[72,128]{1,0:T(1,128)}', space=vmem, size = 0x9000, scoped, tag = 'internal scratch']
  %s0 = inlined_call_operand.vmem [shape: f32[3,16,32], index: 0, kind: input, shape index: {}]
  %s1 = inlined_call_operand.vmem [shape: f32[12,32,8], index: 1, kind: input, shape index: {}]
  %s2 = inlined_call_operand.vmem [shape: f32[12,1,8], index: 2, kind: input, shape index: {}]
  %s3 = inlined_call_operand.vmem [shape: f32[32,32], index: 3, kind: input, shape index: {}]
  %s4 = inlined_call_operand.vmem [shape: f32[1,32], index: 4, kind: input, shape index: {}]
  %s5 = inlined_call_operand.vmem [shape: f32[8,8,8], index: 5, kind: input, shape index: {}]
  %s6 = inlined_call_operand.hbm [shape: f32[16,32], index: 6, kind: output, shape index: {}]
  %s7 = sld [smem:[#allocation0]]
  $region34: #{mha_forward.1} parent=0
    _
  %s9 = ssub.s32 1, %s7
  %s10 = scalar_select 0, %s9, %s7
  $region1: #{mha_forward.1} parent=0
    #allocation2 [shape = 'u8[8192]{0}', space=vmem, size = 0x2000, scoped, tag = 'output window, operand 0, single buffered']
    #allocation3 [shape = 's32[1]{0}', space=sflag, size = 0x4, scoped, tag = 'scoped memory for mha_forward.1']
    %11 = vsyncpa [#allocation3], 0
    // Predicated region
    $region2: #{mha_forward.1} parent=1 // pred_check
      _
    $region3: #{mha_forward.1} parent=1 // pred_check_branch
      %13 = sbr.rel (0) target = $region5
    $region4: #{mha_forward.1} parent=1 // pred_region
      _
    $region5: #{mha_forward.1} parent=1 // pred_fallthru
      _
    // Predicated region
    $region6: #{mha_forward.1} parent=1 // pred_check
      _
    $region7: #{mha_forward.1} parent=1 // pred_check_branch
      %15 = sbr.rel (0) target = $region9
    $region8: #{mha_forward.1} parent=1 // pred_region
      _
    $region9: #{mha_forward.1} parent=1 // pred_fallthru
      _
    // Predicated region
    $region10: #{mha_forward.1} parent=1 // pred_check
      _
    $region11: #{mha_forward.1} parent=1 // pred_check_branch
      %17 = sbr.rel (0) target = $region13
    $region12: #{mha_forward.1} parent=1 // pred_region
      _
    $region13: #{mha_forward.1} parent=1 // pred_fallthru
      _
    // Predicated region
    $region14: #{mha_forward.1} parent=1 // pred_check
      _
    $region15: #{mha_forward.1} parent=1 // pred_check_branch
      %19 = sbr.rel (0) target = $region17
    $region16: #{mha_forward.1} parent=1 // pred_region
      _
    $region17: #{mha_forward.1} parent=1 // pred_fallthru
      _
    // Predicated region
    $region18: #{mha_forward.1} parent=1 // pred_check
      _
    $region19: #{mha_forward.1} parent=1 // pred_check_branch
      %21 = sbr.rel (0) target = $region21
    $region20: #{mha_forward.1} parent=1 // pred_region
      _
    $region21: #{mha_forward.1} parent=1 // pred_fallthru
      _
    // Predicated region
    $region22: #{mha_forward.1} parent=1 // pred_check
      _
    $region23: #{mha_forward.1} parent=1 // pred_check_branch
      %23 = sbr.rel (0) target = $region25
    $region24: #{mha_forward.1} parent=1 // pred_region
      _
    $region25: #{mha_forward.1} parent=1 // pred_fallthru
      _
    %v24 = vld [vmem:[%s0] sm:$0xff]
    %v25 = vld [vmem:[%s0 + $0x8] sm:$0xff]
    %v26 = vld [vmem:[%s1] sm:$0xff]
    %v27 = vld [vmem:[%s1 + $0x8] sm:$0xff]
    %v28 = vld [vmem:[%s1 + $0x10] sm:$0xff]
    %v29 = vld [vmem:[%s1 + $0x18] sm:$0xff]
    %v30 = vld [vmem:[%s2] sm:$0x1]
    %v32 = vperm.slane %v30, 0
    %vm34 = vcmask 261120
    %v36 = vsel %vm34, %v24, 0
    %v39 = vsel %vm34, %v25, 0
    %41 = vmatpush.msra.mxu0 0.0
    %42 = vmatpush.msra.mxu0 0.0
    %43 = vmatpush.msra.mxu0 0.0
    %44 = vmatpush.msra.mxu0 0.0
    %45 = vmatpush.msra.mxu0 0.0
    %46 = vmatpush.msra.mxu0 0.0
    %47 = vmatpush.msra.mxu0 0.0
    %48 = vmatpush.msra.mxu0 0.0
    %49 = vmatpush.msra.mxu0 0.0
    %50 = vmatpush.msra.mxu0 0.0
    %51 = vmatpush.msra.mxu0 0.0
    %52 = vmatpush.msra.mxu0 0.0
    %53 = vmatpush.msra.mxu0 %v29
    %54 = vmatpush.msra.mxu0 %v28
    %55 = vmatpush.msra.mxu0 %v27
    %56 = vmatpush.msra.mxu0 %v26
    %57 = vmatmul.f32.gmra.mxu0 %v36
    %v58 = vpop.f32.mrf.mxu0
    %v59 = vadd.f32 %v32, %v58
    %60 = vmatmul.f32.gmra.mxu0 %v39
    %v61 = vpop.f32.mrf.mxu0
    %v62 = vadd.f32 %v32, %v61
    %63 = vdwg.mxu0
    %s64 = scalar_lea.vmem %s1, 32
    %v65 = vld [vmem:[%s64] sm:$0xff]
    %v66 = vld [vmem:[%s64 + $0x8] sm:$0xff]
    %v67 = vld [vmem:[%s64 + $0x10] sm:$0xff]
    %v68 = vld [vmem:[%s64 + $0x18] sm:$0xff]
    %s69 = scalar_lea.vmem %s2, 1
    %v70 = vld [vmem:[%s69] sm:$0x1]
    %v72 = vperm.slane %v70, 0
    %74 = vmatpush.msra.mxu0 0.0
    %75 = vmatpush.msra.mxu0 0.0
    %76 = vmatpush.msra.mxu0 0.0
    %77 = vmatpush.msra.mxu0 0.0
    %78 = vmatpush.msra.mxu0 0.0
    %79 = vmatpush.msra.mxu0 0.0
    %80 = vmatpush.msra.mxu0 0.0
    %81 = vmatpush.msra.mxu0 0.0
    %82 = vmatpush.msra.mxu0 0.0
    %83 = vmatpush.msra.mxu0 0.0
    %84 = vmatpush.msra.mxu0 0.0
    %85 = vmatpush.msra.mxu0 0.0
    %86 = vmatpush.msra.mxu0 %v68
    %87 = vmatpush.msra.mxu0 %v67
    %88 = vmatpush.msra.mxu0 %v66
    %89 = vmatpush.msra.mxu0 %v65
    %90 = vmatmul.f32.gmra.mxu0 %v36
    %v91 = vpop.f32.mrf.mxu0
    %v92 = vadd.f32 %v72, %v91
    %93 = vmatmul.f32.gmra.mxu0 %v39
    %v94 = vpop.f32.mrf.mxu0
    %v95 = vadd.f32 %v72, %v94
    %96 = vdwg.mxu0
    %s97 = scalar_lea.vmem %s1, 64
    %v98 = vld [vmem:[%s97] sm:$0xff]
    %v99 = vld [vmem:[%s97 + $0x8] sm:$0xff]
    %v100 = vld [vmem:[%s97 + $0x10] sm:$0xff]
    %v101 = vld [vmem:[%s97 + $0x18] sm:$0xff]
    %s102 = scalar_lea.vmem %s2, 2
    %v103 = vld [vmem:[%s102] sm:$0x1]
    %v105 = vperm.slane %v103, 0
    %107 = vmatpush.msra.mxu0 0.0
    %108 = vmatpush.msra.mxu0 0.0
    %109 = vmatpush.msra.mxu0 0.0
    %110 = vmatpush.msra.mxu0 0.0
    %111 = vmatpush.msra.mxu0 0.0
    %112 = vmatpush.msra.mxu0 0.0
    %113 = vmatpush.msra.mxu0 0.0
    %114 = vmatpush.msra.mxu0 0.0
    %115 = vmatpush.msra.mxu0 0.0
    %116 = vmatpush.msra.mxu0 0.0
    %117 = vmatpush.msra.mxu0 0.0
    %118 = vmatpush.msra.mxu0 0.0
    %119 = vmatpush.msra.mxu0 %v101
    %120 = vmatpush.msra.mxu0 %v100
    %121 = vmatpush.msra.mxu0 %v99
    %122 = vmatpush.msra.mxu0 %v98
    %123 = vmatmul.f32.gmra.mxu0 %v36
    %v124 = vpop.f32.mrf.mxu0
    %v125 = vadd.f32 %v105, %v124
    %126 = vmatmul.f32.gmra.mxu0 %v39
    %v127 = vpop.f32.mrf.mxu0
    %v128 = vadd.f32 %v105, %v127
    %129 = vdwg.mxu0
    %s130 = scalar_lea.vmem %s1, 96
    %v131 = vld [vmem:[%s130] sm:$0xff]
    %v132 = vld [vmem:[%s130 + $0x8] sm:$0xff]
    %v133 = vld [vmem:[%s130 + $0x10] sm:$0xff]
    %v134 = vld [vmem:[%s130 + $0x18] sm:$0xff]
    %s135 = scalar_lea.vmem %s2, 3
    %v136 = vld [vmem:[%s135] sm:$0x1]
    %v138 = vperm.slane %v136, 0
    %140 = vmatpush.msra.mxu0 0.0
    %141 = vmatpush.msra.mxu0 0.0
    %142 = vmatpush.msra.mxu0 0.0
    %143 = vmatpush.msra.mxu0 0.0
    %144 = vmatpush.msra.mxu0 0.0
    %145 = vmatpush.msra.mxu0 0.0
    %146 = vmatpush.msra.mxu0 0.0
    %147 = vmatpush.msra.mxu0 0.0
    %148 = vmatpush.msra.mxu0 0.0
    %149 = vmatpush.msra.mxu0 0.0
    %150 = vmatpush.msra.mxu0 0.0
    %151 = vmatpush.msra.mxu0 0.0
    %152 = vmatpush.msra.mxu0 %v134
    %153 = vmatpush.msra.mxu0 %v133
    %154 = vmatpush.msra.mxu0 %v132
    %155 = vmatpush.msra.mxu0 %v131
    %156 = vmatmul.f32.gmra.mxu0 %v36
    %v157 = vpop.f32.mrf.mxu0
    %v158 = vadd.f32 %v138, %v157
    %159 = vmatmul.f32.gmra.mxu0 %v39
    %v160 = vpop.f32.mrf.mxu0
    %v161 = vadd.f32 %v138, %v160
    %162 = vdwg.mxu0
    %s163 = scalar_lea.vmem %s0, 16
    %v164 = vld [vmem:[%s163] sm:$0xff]
    %v165 = vld [vmem:[%s163 + $0x8] sm:$0xff]
    %s166 = scalar_lea.vmem %s1, 128
    %v167 = vld [vmem:[%s166] sm:$0xff]
    %v168 = vld [vmem:[%s166 + $0x8] sm:$0xff]
    %v169 = vld [vmem:[%s166 + $0x10] sm:$0xff]
    %v170 = vld [vmem:[%s166 + $0x18] sm:$0xff]
    %s171 = scalar_lea.vmem %s2, 4
    %v172 = vld [vmem:[%s171] sm:$0x1]
    %v174 = vperm.slane %v172, 0
    %v177 = vsel %vm34, %v164, 0
    %v180 = vsel %vm34, %v165, 0
    %182 = vmatpush.msra.mxu0 0.0
    %183 = vmatpush.msra.mxu0 0.0
    %184 = vmatpush.msra.mxu0 0.0
    %185 = vmatpush.msra.mxu0 0.0
    %186 = vmatpush.msra.mxu0 0.0
    %187 = vmatpush.msra.mxu0 0.0
    %188 = vmatpush.msra.mxu0 0.0
    %189 = vmatpush.msra.mxu0 0.0
    %190 = vmatpush.msra.mxu0 0.0
    %191 = vmatpush.msra.mxu0 0.0
    %192 = vmatpush.msra.mxu0 0.0
    %193 = vmatpush.msra.mxu0 0.0
    %194 = vmatpush.msra.mxu0 %v170
    %195 = vmatpush.msra.mxu0 %v169
    %196 = vmatpush.msra.mxu0 %v168
    %197 = vmatpush.msra.mxu0 %v167
    %198 = vmatmul.f32.gmra.mxu0 %v177
    %v199 = vpop.f32.mrf.mxu0
    %v200 = vadd.f32 %v174, %v199
    %201 = vmatmul.f32.gmra.mxu0 %v180
    %v202 = vpop.f32.mrf.mxu0
    %v203 = vadd.f32 %v174, %v202
    %204 = vdwg.mxu0
    %s205 = scalar_lea.vmem %s1, 160
    %v206 = vld [vmem:[%s205] sm:$0xff]
    %v207 = vld [vmem:[%s205 + $0x8] sm:$0xff]
    %v208 = vld [vmem:[%s205 + $0x10] sm:$0xff]
    %v209 = vld [vmem:[%s205 + $0x18] sm:$0xff]
    %s210 = scalar_lea.vmem %s2, 5
    %v211 = vld [vmem:[%s210] sm:$0x1]
    %v213 = vperm.slane %v211, 0
    %215 = vmatpush.msra.mxu0 0.0
    %216 = vmatpush.msra.mxu0 0.0
    %217 = vmatpush.msra.mxu0 0.0
    %218 = vmatpush.msra.mxu0 0.0
    %219 = vmatpush.msra.mxu0 0.0
    %220 = vmatpush.msra.mxu0 0.0
    %221 = vmatpush.msra.mxu0 0.0
    %222 = vmatpush.msra.mxu0 0.0
    %223 = vmatpush.msra.mxu0 0.0
    %224 = vmatpush.msra.mxu0 0.0
    %225 = vmatpush.msra.mxu0 0.0
    %226 = vmatpush.msra.mxu0 0.0
    %227 = vmatpush.msra.mxu0 %v209
    %228 = vmatpush.msra.mxu0 %v208
    %229 = vmatpush.msra.mxu0 %v207
    %230 = vmatpush.msra.mxu0 %v206
    %231 = vmatmul.f32.gmra.mxu0 %v177
    %v232 = vpop.f32.mrf.mxu0
    %v233 = vadd.f32 %v213, %v232
    %234 = vmatmul.f32.gmra.mxu0 %v180
    %v235 = vpop.f32.mrf.mxu0
    %v236 = vadd.f32 %v213, %v235
    %237 = vdwg.mxu0
    %s238 = scalar_lea.vmem %s1, 192
    %v239 = vld [vmem:[%s238] sm:$0xff]
    %v240 = vld [vmem:[%s238 + $0x8] sm:$0xff]
    %v241 = vld [vmem:[%s238 + $0x10] sm:$0xff]
    %v242 = vld [vmem:[%s238 + $0x18] sm:$0xff]
    %s243 = scalar_lea.vmem %s2, 6
    %v244 = vld [vmem:[%s243] sm:$0x1]
    %v246 = vperm.slane %v244, 0
    %248 = vmatpush.msra.mxu0 0.0
    %249 = vmatpush.msra.mxu0 0.0
    %250 = vmatpush.msra.mxu0 0.0
    %251 = vmatpush.msra.mxu0 0.0
    %252 = vmatpush.msra.mxu0 0.0
    %253 = vmatpush.msra.mxu0 0.0
    %254 = vmatpush.msra.mxu0 0.0
    %255 = vmatpush.msra.mxu0 0.0
    %256 = vmatpush.msra.mxu0 0.0
    %257 = vmatpush.msra.mxu0 0.0
    %258 = vmatpush.msra.mxu0 0.0
    %259 = vmatpush.msra.mxu0 0.0
    %260 = vmatpush.msra.mxu0 %v242
    %261 = vmatpush.msra.mxu0 %v241
    %262 = vmatpush.msra.mxu0 %v240
    %263 = vmatpush.msra.mxu0 %v239
    %264 = vmatmul.f32.gmra.mxu0 %v177
    %v265 = vpop.f32.mrf.mxu0
    %v266 = vadd.f32 %v246, %v265
    %267 = vmatmul.f32.gmra.mxu0 %v180
    %v268 = vpop.f32.mrf.mxu0
    %v269 = vadd.f32 %v246, %v268
    %270 = vdwg.mxu0
    %s271 = scalar_lea.vmem %s1, 224
    %v272 = vld [vmem:[%s271] sm:$0xff]
    %v273 = vld [vmem:[%s271 + $0x8] sm:$0xff]
    %v274 = vld [vmem:[%s271 + $0x10] sm:$0xff]
    %v275 = vld [vmem:[%s271 + $0x18] sm:$0xff]
    %s276 = scalar_lea.vmem %s2, 7
    %v277 = vld [vmem:[%s276] sm:$0x1]
    %v279 = vperm.slane %v277, 0
    %281 = vmatpush.msra.mxu0 0.0
    %282 = vmatpush.msra.mxu0 0.0
    %283 = vmatpush.msra.mxu0 0.0
    %284 = vmatpush.msra.mxu0 0.0
    %285 = vmatpush.msra.mxu0 0.0
    %286 = vmatpush.msra.mxu0 0.0
    %287 = vmatpush.msra.mxu0 0.0
    %288 = vmatpush.msra.mxu0 0.0
    %289 = vmatpush.msra.mxu0 0.0
    %290 = vmatpush.msra.mxu0 0.0
    %291 = vmatpush.msra.mxu0 0.0
    %292 = vmatpush.msra.mxu0 0.0
    %293 = vmatpush.msra.mxu0 %v275
    %294 = vmatpush.msra.mxu0 %v274
    %295 = vmatpush.msra.mxu0 %v273
    %296 = vmatpush.msra.mxu0 %v272
    %297 = vmatmul.f32.gmra.mxu0 %v177
    %v298 = vpop.f32.mrf.mxu0
    %v299 = vadd.f32 %v279, %v298
    %300 = vmatmul.f32.gmra.mxu0 %v180
    %v301 = vpop.f32.mrf.mxu0
    %v302 = vadd.f32 %v279, %v301
    %303 = vdwg.mxu0
    %s304 = scalar_lea.vmem %s0, 32
    %v305 = vld [vmem:[%s304] sm:$0xff]
    %v306 = vld [vmem:[%s304 + $0x8] sm:$0xff]
    %s307 = scalar_lea.vmem %s1, 256
    %v308 = vld [vmem:[%s307] sm:$0xff]
    %v309 = vld [vmem:[%s307 + $0x8] sm:$0xff]
    %v310 = vld [vmem:[%s307 + $0x10] sm:$0xff]
    %v311 = vld [vmem:[%s307 + $0x18] sm:$0xff]
    %s312 = scalar_lea.vmem %s2, 8
    %v313 = vld [vmem:[%s312] sm:$0x1]
    %v315 = vperm.slane %v313, 0
    %v318 = vsel %vm34, %v305, 0
    %v321 = vsel %vm34, %v306, 0
    %323 = vmatpush.msra.mxu0 0.0
    %324 = vmatpush.msra.mxu0 0.0
    %325 = vmatpush.msra.mxu0 0.0
    %326 = vmatpush.msra.mxu0 0.0
    %327 = vmatpush.msra.mxu0 0.0
    %328 = vmatpush.msra.mxu0 0.0
    %329 = vmatpush.msra.mxu0 0.0
    %330 = vmatpush.msra.mxu0 0.0
    %331 = vmatpush.msra.mxu0 0.0
    %332 = vmatpush.msra.mxu0 0.0
    %333 = vmatpush.msra.mxu0 0.0
    %334 = vmatpush.msra.mxu0 0.0
    %335 = vmatpush.msra.mxu0 %v311
    %336 = vmatpush.msra.mxu0 %v310
    %337 = vmatpush.msra.mxu0 %v309
    %338 = vmatpush.msra.mxu0 %v308
    %339 = vmatmul.f32.gmra.mxu0 %v318
    %v340 = vpop.f32.mrf.mxu0
    %v341 = vadd.f32 %v315, %v340
    %342 = vmatmul.f32.gmra.mxu0 %v321
    %v343 = vpop.f32.mrf.mxu0
    %v344 = vadd.f32 %v315, %v343
    %345 = vdwg.mxu0
    %s346 = scalar_lea.vmem %s1, 288
    %v347 = vld [vmem:[%s346] sm:$0xff]
    %v348 = vld [vmem:[%s346 + $0x8] sm:$0xff]
    %v349 = vld [vmem:[%s346 + $0x10] sm:$0xff]
    %v350 = vld [vmem:[%s346 + $0x18] sm:$0xff]
    %s351 = scalar_lea.vmem %s2, 9
    %v352 = vld [vmem:[%s351] sm:$0x1]
    %v354 = vperm.slane %v352, 0
    %356 = vmatpush.msra.mxu0 0.0
    %357 = vmatpush.msra.mxu0 0.0
    %358 = vmatpush.msra.mxu0 0.0
    %359 = vmatpush.msra.mxu0 0.0
    %360 = vmatpush.msra.mxu0 0.0
    %361 = vmatpush.msra.mxu0 0.0
    %362 = vmatpush.msra.mxu0 0.0
    %363 = vmatpush.msra.mxu0 0.0
    %364 = vmatpush.msra.mxu0 0.0
    %365 = vmatpush.msra.mxu0 0.0
    %366 = vmatpush.msra.mxu0 0.0
    %367 = vmatpush.msra.mxu0 0.0
    %368 = vmatpush.msra.mxu0 %v350
    %369 = vmatpush.msra.mxu0 %v349
    %370 = vmatpush.msra.mxu0 %v348
    %371 = vmatpush.msra.mxu0 %v347
    %372 = vmatmul.f32.gmra.mxu0 %v318
    %v373 = vpop.f32.mrf.mxu0
    %v374 = vadd.f32 %v354, %v373
    %375 = vmatmul.f32.gmra.mxu0 %v321
    %v376 = vpop.f32.mrf.mxu0
    %v377 = vadd.f32 %v354, %v376
    %378 = vdwg.mxu0
    %s379 = scalar_lea.vmem %s1, 320
    %v380 = vld [vmem:[%s379] sm:$0xff]
    %v381 = vld [vmem:[%s379 + $0x8] sm:$0xff]
    %v382 = vld [vmem:[%s379 + $0x10] sm:$0xff]
    %v383 = vld [vmem:[%s379 + $0x18] sm:$0xff]
    %s384 = scalar_lea.vmem %s2, 10
    %v385 = vld [vmem:[%s384] sm:$0x1]
    %v387 = vperm.slane %v385, 0
    %389 = vmatpush.msra.mxu0 0.0
    %390 = vmatpush.msra.mxu0 0.0
    %391 = vmatpush.msra.mxu0 0.0
    %392 = vmatpush.msra.mxu0 0.0
    %393 = vmatpush.msra.mxu0 0.0
    %394 = vmatpush.msra.mxu0 0.0
    %395 = vmatpush.msra.mxu0 0.0
    %396 = vmatpush.msra.mxu0 0.0
    %397 = vmatpush.msra.mxu0 0.0
    %398 = vmatpush.msra.mxu0 0.0
    %399 = vmatpush.msra.mxu0 0.0
    %400 = vmatpush.msra.mxu0 0.0
    %401 = vmatpush.msra.mxu0 %v383
    %402 = vmatpush.msra.mxu0 %v382
    %403 = vmatpush.msra.mxu0 %v381
    %404 = vmatpush.msra.mxu0 %v380
    %405 = vmatmul.f32.gmra.mxu0 %v318
    %v406 = vpop.f32.mrf.mxu0
    %v407 = vadd.f32 %v387, %v406
    %408 = vmatmul.f32.gmra.mxu0 %v321
    %v409 = vpop.f32.mrf.mxu0
    %v410 = vadd.f32 %v387, %v409
    %411 = vdwg.mxu0
    %s412 = scalar_lea.vmem %s1, 352
    %v413 = vld [vmem:[%s412] sm:$0xff]
    %v414 = vld [vmem:[%s412 + $0x8] sm:$0xff]
    %v415 = vld [vmem:[%s412 + $0x10] sm:$0xff]
    %v416 = vld [vmem:[%s412 + $0x18] sm:$0xff]
    %s417 = scalar_lea.vmem %s2, 11
    %v418 = vld [vmem:[%s417] sm:$0x1]
    %v420 = vperm.slane %v418, 0
    %422 = vmatpush.msra.mxu0 0.0
    %423 = vmatpush.msra.mxu0 0.0
    %424 = vmatpush.msra.mxu0 0.0
    %425 = vmatpush.msra.mxu0 0.0
    %426 = vmatpush.msra.mxu0 0.0
    %427 = vmatpush.msra.mxu0 0.0
    %428 = vmatpush.msra.mxu0 0.0
    %429 = vmatpush.msra.mxu0 0.0
    %430 = vmatpush.msra.mxu0 0.0
    %431 = vmatpush.msra.mxu0 0.0
    %432 = vmatpush.msra.mxu0 0.0
    %433 = vmatpush.msra.mxu0 0.0
    %434 = vmatpush.msra.mxu0 %v416
    %435 = vmatpush.msra.mxu0 %v415
    %436 = vmatpush.msra.mxu0 %v414
    %437 = vmatpush.msra.mxu0 %v413
    %438 = vmatmul.f32.gmra.mxu0 %v318
    %v439 = vpop.f32.mrf.mxu0
    %v440 = vadd.f32 %v420, %v439
    %441 = vmatmul.f32.gmra.mxu0 %v321
    %v442 = vpop.f32.mrf.mxu0
    %v443 = vadd.f32 %v420, %v442
    %444 = vdwg.mxu0
    %v445 = vld [vmem:[%s5] sm:$0xff]
    %v446 = vld [vmem:[%s5 + $0x8] sm:$0xff]
    %v447 = vld [vmem:[%s5 + $0x10] sm:$0xff]
    %v448 = vld [vmem:[%s5 + $0x18] sm:$0xff]
    %v449 = vld [vmem:[%s5 + $0x20] sm:$0xff]
    %v450 = vld [vmem:[%s5 + $0x28] sm:$0xff]
    %v451 = vld [vmem:[%s5 + $0x30] sm:$0xff]
    %v452 = vld [vmem:[%s5 + $0x38] sm:$0xff]
    %vm453 = vcmask 64512
    %v455 = vsel %vm453, %v59, 0
    %v458 = vsel %vm453, %v200, 0
    %460 = vmatpush.xpose.msra.mxu0 0.0
    %461 = vmatpush.xpose.msra.mxu0 0.0
    %462 = vmatpush.xpose.msra.mxu0 0.0
    %463 = vmatpush.xpose.msra.mxu0 0.0
    %464 = vmatpush.xpose.msra.mxu0 0.0
    %465 = vmatpush.xpose.msra.mxu0 0.0
    %466 = vmatpush.xpose.msra.mxu0 0.0
    %467 = vmatpush.xpose.msra.mxu0 0.0
    %468 = vmatpush.xpose.msra.mxu0 0.0
    %469 = vmatpush.xpose.msra.mxu0 0.0
    %470 = vmatpush.xpose.msra.mxu0 0.0
    %471 = vmatpush.xpose.msra.mxu0 0.0
    %472 = vmatpush.xpose.msra.mxu0 0.0
    %473 = vmatpush.xpose.msra.mxu0 0.0
    %474 = vmatpush.xpose.msra.mxu0 0.0
    %475 = vmatpush.xpose.msra.mxu0 %v458
    %476 = vmatmul.f32.gmra.mxu0 %v455
    %v477 = vpop.f32.mrf.mxu0
    %v478 = vadd.f32 %v445, %v477
    %479 = vdwg.mxu0
    %v481 = vsel %vm453, %v92, 0
    %v484 = vsel %vm453, %v233, 0
    %486 = vmatpush.xpose.msra.mxu0 0.0
    %487 = vmatpush.xpose.msra.mxu0 0.0
    %488 = vmatpush.xpose.msra.mxu0 0.0
    %489 = vmatpush.xpose.msra.mxu0 0.0
    %490 = vmatpush.xpose.msra.mxu0 0.0
    %491 = vmatpush.xpose.msra.mxu0 0.0
    %492 = vmatpush.xpose.msra.mxu0 0.0
    %493 = vmatpush.xpose.msra.mxu0 0.0
    %494 = vmatpush.xpose.msra.mxu0 0.0
    %495 = vmatpush.xpose.msra.mxu0 0.0
    %496 = vmatpush.xpose.msra.mxu0 0.0
    %497 = vmatpush.xpose.msra.mxu0 0.0
    %498 = vmatpush.xpose.msra.mxu0 0.0
    %499 = vmatpush.xpose.msra.mxu0 0.0
    %500 = vmatpush.xpose.msra.mxu0 0.0
    %501 = vmatpush.xpose.msra.mxu0 %v484
    %502 = vmatmul.f32.gmra.mxu0 %v481
    %v503 = vpop.f32.mrf.mxu0
    %v504 = vadd.f32 %v446, %v503
    %505 = vdwg.mxu0
    %v507 = vsel %vm453, %v125, 0
    %v510 = vsel %vm453, %v266, 0
    %512 = vmatpush.xpose.msra.mxu0 0.0
    %513 = vmatpush.xpose.msra.mxu0 0.0
    %514 = vmatpush.xpose.msra.mxu0 0.0
    %515 = vmatpush.xpose.msra.mxu0 0.0
    %516 = vmatpush.xpose.msra.mxu0 0.0
    %517 = vmatpush.xpose.msra.mxu0 0.0
    %518 = vmatpush.xpose.msra.mxu0 0.0
    %519 = vmatpush.xpose.msra.mxu0 0.0
    %520 = vmatpush.xpose.msra.mxu0 0.0
    %521 = vmatpush.xpose.msra.mxu0 0.0
    %522 = vmatpush.xpose.msra.mxu0 0.0
    %523 = vmatpush.xpose.msra.mxu0 0.0
    %524 = vmatpush.xpose.msra.mxu0 0.0
    %525 = vmatpush.xpose.msra.mxu0 0.0
    %526 = vmatpush.xpose.msra.mxu0 0.0
    %527 = vmatpush.xpose.msra.mxu0 %v510
    %528 = vmatmul.f32.gmra.mxu0 %v507
    %v529 = vpop.f32.mrf.mxu0
    %v530 = vadd.f32 %v447, %v529
    %531 = vdwg.mxu0
    %v533 = vsel %vm453, %v158, 0
    %v536 = vsel %vm453, %v299, 0
    %538 = vmatpush.xpose.msra.mxu0 0.0
    %539 = vmatpush.xpose.msra.mxu0 0.0
    %540 = vmatpush.xpose.msra.mxu0 0.0
    %541 = vmatpush.xpose.msra.mxu0 0.0
    %542 = vmatpush.xpose.msra.mxu0 0.0
    %543 = vmatpush.xpose.msra.mxu0 0.0
    %544 = vmatpush.xpose.msra.mxu0 0.0
    %545 = vmatpush.xpose.msra.mxu0 0.0
    %546 = vmatpush.xpose.msra.mxu0 0.0
    %547 = vmatpush.xpose.msra.mxu0 0.0
    %548 = vmatpush.xpose.msra.mxu0 0.0
    %549 = vmatpush.xpose.msra.mxu0 0.0
    %550 = vmatpush.xpose.msra.mxu0 0.0
    %551 = vmatpush.xpose.msra.mxu0 0.0
    %552 = vmatpush.xpose.msra.mxu0 0.0
    %553 = vmatpush.xpose.msra.mxu0 %v536
    %554 = vmatmul.f32.gmra.mxu0 %v533
    %v555 = vpop.f32.mrf.mxu0
    %v556 = vadd.f32 %v448, %v555
    %557 = vdwg.mxu0
    %v559 = vsel %vm453, %v62, 0
    %v562 = vsel %vm453, %v203, 0
    %564 = vmatpush.xpose.msra.mxu0 0.0
    %565 = vmatpush.xpose.msra.mxu0 0.0
    %566 = vmatpush.xpose.msra.mxu0 0.0
    %567 = vmatpush.xpose.msra.mxu0 0.0
    %568 = vmatpush.xpose.msra.mxu0 0.0
    %569 = vmatpush.xpose.msra.mxu0 0.0
    %570 = vmatpush.xpose.msra.mxu0 0.0
    %571 = vmatpush.xpose.msra.mxu0 0.0
    %572 = vmatpush.xpose.msra.mxu0 0.0
    %573 = vmatpush.xpose.msra.mxu0 0.0
    %574 = vmatpush.xpose.msra.mxu0 0.0
    %575 = vmatpush.xpose.msra.mxu0 0.0
    %576 = vmatpush.xpose.msra.mxu0 0.0
    %577 = vmatpush.xpose.msra.mxu0 0.0
    %578 = vmatpush.xpose.msra.mxu0 0.0
    %579 = vmatpush.xpose.msra.mxu0 %v562
    %580 = vmatmul.f32.gmra.mxu0 %v559
    %v581 = vpop.f32.mrf.mxu0
    %v582 = vadd.f32 %v449, %v581
    %583 = vdwg.mxu0
    %v585 = vsel %vm453, %v95, 0
    %v588 = vsel %vm453, %v236, 0
    %590 = vmatpush.xpose.msra.mxu0 0.0
    %591 = vmatpush.xpose.msra.mxu0 0.0
    %592 = vmatpush.xpose.msra.mxu0 0.0
    %593 = vmatpush.xpose.msra.mxu0 0.0
    %594 = vmatpush.xpose.msra.mxu0 0.0
    %595 = vmatpush.xpose.msra.mxu0 0.0
    %596 = vmatpush.xpose.msra.mxu0 0.0
    %597 = vmatpush.xpose.msra.mxu0 0.0
    %598 = vmatpush.xpose.msra.mxu0 0.0
    %599 = vmatpush.xpose.msra.mxu0 0.0
    %600 = vmatpush.xpose.msra.mxu0 0.0
    %601 = vmatpush.xpose.msra.mxu0 0.0
    %602 = vmatpush.xpose.msra.mxu0 0.0
    %603 = vmatpush.xpose.msra.mxu0 0.0
    %604 = vmatpush.xpose.msra.mxu0 0.0
    %605 = vmatpush.xpose.msra.mxu0 %v588
    %606 = vmatmul.f32.gmra.mxu0 %v585
    %v607 = vpop.f32.mrf.mxu0
    %v608 = vadd.f32 %v450, %v607
    %609 = vdwg.mxu0
    %v611 = vsel %vm453, %v128, 0
    %v614 = vsel %vm453, %v269, 0
    %616 = vmatpush.xpose.msra.mxu0 0.0
    %617 = vmatpush.xpose.msra.mxu0 0.0
    %618 = vmatpush.xpose.msra.mxu0 0.0
    %619 = vmatpush.xpose.msra.mxu0 0.0
    %620 = vmatpush.xpose.msra.mxu0 0.0
    %621 = vmatpush.xpose.msra.mxu0 0.0
    %622 = vmatpush.xpose.msra.mxu0 0.0
    %623 = vmatpush.xpose.msra.mxu0 0.0
    %624 = vmatpush.xpose.msra.mxu0 0.0
    %625 = vmatpush.xpose.msra.mxu0 0.0
    %626 = vmatpush.xpose.msra.mxu0 0.0
    %627 = vmatpush.xpose.msra.mxu0 0.0
    %628 = vmatpush.xpose.msra.mxu0 0.0
    %629 = vmatpush.xpose.msra.mxu0 0.0
    %630 = vmatpush.xpose.msra.mxu0 0.0
    %631 = vmatpush.xpose.msra.mxu0 %v614
    %632 = vmatmul.f32.gmra.mxu0 %v611
    %v633 = vpop.f32.mrf.mxu0
    %v634 = vadd.f32 %v451, %v633
    %635 = vdwg.mxu0
    %v637 = vsel %vm453, %v161, 0
    %v640 = vsel %vm453, %v302, 0
    %642 = vmatpush.xpose.msra.mxu0 0.0
    %643 = vmatpush.xpose.msra.mxu0 0.0
    %644 = vmatpush.xpose.msra.mxu0 0.0
    %645 = vmatpush.xpose.msra.mxu0 0.0
    %646 = vmatpush.xpose.msra.mxu0 0.0
    %647 = vmatpush.xpose.msra.mxu0 0.0
    %648 = vmatpush.xpose.msra.mxu0 0.0
    %649 = vmatpush.xpose.msra.mxu0 0.0
    %650 = vmatpush.xpose.msra.mxu0 0.0
    %651 = vmatpush.xpose.msra.mxu0 0.0
    %652 = vmatpush.xpose.msra.mxu0 0.0
    %653 = vmatpush.xpose.msra.mxu0 0.0
    %654 = vmatpush.xpose.msra.mxu0 0.0
    %655 = vmatpush.xpose.msra.mxu0 0.0
    %656 = vmatpush.xpose.msra.mxu0 0.0
    %657 = vmatpush.xpose.msra.mxu0 %v640
    %658 = vmatmul.f32.gmra.mxu0 %v637
    %v659 = vpop.f32.mrf.mxu0
    %v660 = vadd.f32 %v452, %v659
    %661 = vdwg.mxu0
    %v662 = vsel %vm453, %v478, -inf
    %663 = vmax.xlane.f32.xlu0 %v662
    %v664 = vpop.xlane.xlu0 %663
    %v665 = vsel %vm453, %v504, -inf
    %666 = vmax.xlane.f32.xlu0 %v665
    %v667 = vpop.xlane.xlu0 %666
    %v668 = vsel %vm453, %v530, -inf
    %669 = vmax.xlane.f32.xlu0 %v668
    %v670 = vpop.xlane.xlu0 %669
    %v671 = vsel %vm453, %v556, -inf
    %672 = vmax.xlane.f32.xlu0 %v671
    %v673 = vpop.xlane.xlu0 %672
    %v674 = vsel %vm453, %v582, -inf
    %675 = vmax.xlane.f32.xlu0 %v674
    %v676 = vpop.xlane.xlu0 %675
    %v677 = vsel %vm453, %v608, -inf
    %678 = vmax.xlane.f32.xlu0 %v677
    %v679 = vpop.xlane.xlu0 %678
    %v680 = vsel %vm453, %v634, -inf
    %681 = vmax.xlane.f32.xlu0 %v680
    %v682 = vpop.xlane.xlu0 %681
    %v683 = vsel %vm453, %v660, -inf
    %684 = vmax.xlane.f32.xlu0 %v683
    %v685 = vpop.xlane.xlu0 %684
    %v686 = vsub.f32 %v478, %v664
    %v687 = vsub.f32 %v504, %v667
    %v688 = vsub.f32 %v530, %v670
    %v689 = vsub.f32 %v556, %v673
    %v690 = vsub.f32 %v582, %v676
    %v691 = vsub.f32 %v608, %v679
    %v692 = vsub.f32 %v634, %v682
    %v693 = vsub.f32 %v660, %v685
    %v694 = vmul.f32 %v686, 1.442695
    %v695 = vpow.pop %v694
    %v696 = vmul.f32 %v687, 1.442695
    %v697 = vpow.pop %v696
    %v698 = vmul.f32 %v688, 1.442695
    %v699 = vpow.pop %v698
    %v700 = vmul.f32 %v689, 1.442695
    %v701 = vpow.pop %v700
    %v702 = vmul.f32 %v690, 1.442695
    %v703 = vpow.pop %v702
    %v704 = vmul.f32 %v691, 1.442695
    %v705 = vpow.pop %v704
    %v706 = vmul.f32 %v692, 1.442695
    %v707 = vpow.pop %v706
    %v708 = vmul.f32 %v693, 1.442695
    %v709 = vpow.pop %v708
    %v710 = vsel %vm453, %v695, 0.0
    %711 = vadd.xlane.f32.xlu0 %v710
    %v712 = vpop.xlane.xlu0 %711
    %v713 = vsel %vm453, %v697, 0.0
    %714 = vadd.xlane.f32.xlu0 %v713
    %v715 = vpop.xlane.xlu0 %714
    %v716 = vsel %vm453, %v699, 0.0
    %717 = vadd.xlane.f32.xlu0 %v716
    %v718 = vpop.xlane.xlu0 %717
    %v719 = vsel %vm453, %v701, 0.0
    %720 = vadd.xlane.f32.xlu0 %v719
    %v721 = vpop.xlane.xlu0 %720
    %v722 = vsel %vm453, %v703, 0.0
    %723 = vadd.xlane.f32.xlu0 %v722
    %v724 = vpop.xlane.xlu0 %723
    %v725 = vsel %vm453, %v705, 0.0
    %726 = vadd.xlane.f32.xlu0 %v725
    %v727 = vpop.xlane.xlu0 %726
    %v728 = vsel %vm453, %v707, 0.0
    %729 = vadd.xlane.f32.xlu0 %v728
    %v730 = vpop.xlane.xlu0 %729
    %v731 = vsel %vm453, %v709, 0.0
    %732 = vadd.xlane.f32.xlu0 %v731
    %v733 = vpop.xlane.xlu0 %732
    %v734 = vrcp.pop %v712
    %v735 = vrcp.pop %v715
    %v736 = vrcp.pop %v718
    %v737 = vrcp.pop %v721
    %v738 = vrcp.pop %v724
    %v739 = vrcp.pop %v727
    %v740 = vrcp.pop %v730
    %v741 = vrcp.pop %v733
    %v742 = vmul.f32 %v712, %v734
    %v743 = vmul.f32 %v715, %v735
    %v744 = vmul.f32 %v718, %v736
    %v745 = vmul.f32 %v721, %v737
    %v746 = vmul.f32 %v724, %v738
    %v747 = vmul.f32 %v727, %v739
    %v748 = vmul.f32 %v730, %v740
    %v749 = vmul.f32 %v733, %v741
    %v750 = vsub.f32 2.0, %v742
    %v751 = vsub.f32 2.0, %v743
    %v752 = vsub.f32 2.0, %v744
    %v753 = vsub.f32 2.0, %v745
    %v754 = vsub.f32 2.0, %v746
    %v755 = vsub.f32 2.0, %v747
    %v756 = vsub.f32 2.0, %v748
    %v757 = vsub.f32 2.0, %v749
    %v758 = vmul.f32 %v734, %v750
    %v759 = vmul.f32 %v735, %v751
    %v760 = vmul.f32 %v736, %v752
    %v761 = vmul.f32 %v737, %v753
    %v762 = vmul.f32 %v738, %v754
    %v763 = vmul.f32 %v739, %v755
    %v764 = vmul.f32 %v740, %v756
    %v765 = vmul.f32 %v741, %v757
    %v766 = vmul.f32 %v695, %v758
    %v767 = vmul.f32 %v697, %v759
    %v768 = vmul.f32 %v699, %v760
    %v769 = vmul.f32 %v701, %v761
    %v770 = vmul.f32 %v703, %v762
    %v771 = vmul.f32 %v705, %v763
    %v772 = vmul.f32 %v707, %v764
    %v773 = vmul.f32 %v709, %v765
    %v775 = vsel %vm453, %v766, 0
    %777 = vmatpush.msra.mxu0 0.0
    %778 = vmatpush.msra.mxu0 0.0
    %779 = vmatpush.msra.mxu0 0.0
    %780 = vmatpush.msra.mxu0 0.0
    %781 = vmatpush.msra.mxu0 0.0
    %782 = vmatpush.msra.mxu0 0.0
    %783 = vmatpush.msra.mxu0 0.0
    %784 = vmatpush.msra.mxu0 0.0
    %785 = vmatpush.msra.mxu0 0.0
    %786 = vmatpush.msra.mxu0 0.0
    %787 = vmatpush.msra.mxu0 0.0
    %788 = vmatpush.msra.mxu0 0.0
    %789 = vmatpush.msra.mxu0 0.0
    %790 = vmatpush.msra.mxu0 0.0
    %791 = vmatpush.msra.mxu0 0.0
    %792 = vmatpush.msra.mxu0 %v341
    %793 = vmatmul.f32.gmra.mxu0 %v775
    %v794 = vpop.f32.mrf.mxu0
    %v795 = vadd.f32 0.0, %v794
    %796 = vdwg.mxu0
    %v798 = vsel %vm453, %v767, 0
    %800 = vmatpush.msra.mxu0 0.0
    %801 = vmatpush.msra.mxu0 0.0
    %802 = vmatpush.msra.mxu0 0.0
    %803 = vmatpush.msra.mxu0 0.0
    %804 = vmatpush.msra.mxu0 0.0
    %805 = vmatpush.msra.mxu0 0.0
    %806 = vmatpush.msra.mxu0 0.0
    %807 = vmatpush.msra.mxu0 0.0
    %808 = vmatpush.msra.mxu0 0.0
    %809 = vmatpush.msra.mxu0 0.0
    %810 = vmatpush.msra.mxu0 0.0
    %811 = vmatpush.msra.mxu0 0.0
    %812 = vmatpush.msra.mxu0 0.0
    %813 = vmatpush.msra.mxu0 0.0
    %814 = vmatpush.msra.mxu0 0.0
    %815 = vmatpush.msra.mxu0 %v374
    %816 = vmatmul.f32.gmra.mxu0 %v798
    %v817 = vpop.f32.mrf.mxu0
    %v818 = vadd.f32 0.0, %v817
    %819 = vdwg.mxu0
    %v821 = vsel %vm453, %v768, 0
    %823 = vmatpush.msra.mxu0 0.0
    %824 = vmatpush.msra.mxu0 0.0
    %825 = vmatpush.msra.mxu0 0.0
    %826 = vmatpush.msra.mxu0 0.0
    %827 = vmatpush.msra.mxu0 0.0
    %828 = vmatpush.msra.mxu0 0.0
    %829 = vmatpush.msra.mxu0 0.0
    %830 = vmatpush.msra.mxu0 0.0
    %831 = vmatpush.msra.mxu0 0.0
    %832 = vmatpush.msra.mxu0 0.0
    %833 = vmatpush.msra.mxu0 0.0
    %834 = vmatpush.msra.mxu0 0.0
    %835 = vmatpush.msra.mxu0 0.0
    %836 = vmatpush.msra.mxu0 0.0
    %837 = vmatpush.msra.mxu0 0.0
    %838 = vmatpush.msra.mxu0 %v407
    %839 = vmatmul.f32.gmra.mxu0 %v821
    %v840 = vpop.f32.mrf.mxu0
    %v841 = vadd.f32 0.0, %v840
    %842 = vdwg.mxu0
    %v844 = vsel %vm453, %v769, 0
    %846 = vmatpush.msra.mxu0 0.0
    %847 = vmatpush.msra.mxu0 0.0
    %848 = vmatpush.msra.mxu0 0.0
    %849 = vmatpush.msra.mxu0 0.0
    %850 = vmatpush.msra.mxu0 0.0
    %851 = vmatpush.msra.mxu0 0.0
    %852 = vmatpush.msra.mxu0 0.0
    %853 = vmatpush.msra.mxu0 0.0
    %854 = vmatpush.msra.mxu0 0.0
    %855 = vmatpush.msra.mxu0 0.0
    %856 = vmatpush.msra.mxu0 0.0
    %857 = vmatpush.msra.mxu0 0.0
    %858 = vmatpush.msra.mxu0 0.0
    %859 = vmatpush.msra.mxu0 0.0
    %860 = vmatpush.msra.mxu0 0.0
    %861 = vmatpush.msra.mxu0 %v440
    %862 = vmatmul.f32.gmra.mxu0 %v844
    %v863 = vpop.f32.mrf.mxu0
    %v864 = vadd.f32 0.0, %v863
    %865 = vdwg.mxu0
    %v867 = vsel %vm453, %v770, 0
    %869 = vmatpush.msra.mxu0 0.0
    %870 = vmatpush.msra.mxu0 0.0
    %871 = vmatpush.msra.mxu0 0.0
    %872 = vmatpush.msra.mxu0 0.0
    %873 = vmatpush.msra.mxu0 0.0
    %874 = vmatpush.msra.mxu0 0.0
    %875 = vmatpush.msra.mxu0 0.0
    %876 = vmatpush.msra.mxu0 0.0
    %877 = vmatpush.msra.mxu0 0.0
    %878 = vmatpush.msra.mxu0 0.0
    %879 = vmatpush.msra.mxu0 0.0
    %880 = vmatpush.msra.mxu0 0.0
    %881 = vmatpush.msra.mxu0 0.0
    %882 = vmatpush.msra.mxu0 0.0
    %883 = vmatpush.msra.mxu0 0.0
    %884 = vmatpush.msra.mxu0 %v344
    %885 = vmatmul.f32.gmra.mxu0 %v867
    %v886 = vpop.f32.mrf.mxu0
    %v887 = vadd.f32 0.0, %v886
    %888 = vdwg.mxu0
    %v890 = vsel %vm453, %v771, 0
    %892 = vmatpush.msra.mxu0 0.0
    %893 = vmatpush.msra.mxu0 0.0
    %894 = vmatpush.msra.mxu0 0.0
    %895 = vmatpush.msra.mxu0 0.0
    %896 = vmatpush.msra.mxu0 0.0
    %897 = vmatpush.msra.mxu0 0.0
    %898 = vmatpush.msra.mxu0 0.0
    %899 = vmatpush.msra.mxu0 0.0
    %900 = vmatpush.msra.mxu0 0.0
    %901 = vmatpush.msra.mxu0 0.0
    %902 = vmatpush.msra.mxu0 0.0
    %903 = vmatpush.msra.mxu0 0.0
    %904 = vmatpush.msra.mxu0 0.0
    %905 = vmatpush.msra.mxu0 0.0
    %906 = vmatpush.msra.mxu0 0.0
    %907 = vmatpush.msra.mxu0 %v377
    %908 = vmatmul.f32.gmra.mxu0 %v890
    %v909 = vpop.f32.mrf.mxu0
    %v910 = vadd.f32 0.0, %v909
    %911 = vdwg.mxu0
    %v913 = vsel %vm453, %v772, 0
    %915 = vmatpush.msra.mxu0 0.0
    %916 = vmatpush.msra.mxu0 0.0
    %917 = vmatpush.msra.mxu0 0.0
    %918 = vmatpush.msra.mxu0 0.0
    %919 = vmatpush.msra.mxu0 0.0
    %920 = vmatpush.msra.mxu0 0.0
    %921 = vmatpush.msra.mxu0 0.0
    %922 = vmatpush.msra.mxu0 0.0
    %923 = vmatpush.msra.mxu0 0.0
    %924 = vmatpush.msra.mxu0 0.0
    %925 = vmatpush.msra.mxu0 0.0
    %926 = vmatpush.msra.mxu0 0.0
    %927 = vmatpush.msra.mxu0 0.0
    %928 = vmatpush.msra.mxu0 0.0
    %929 = vmatpush.msra.mxu0 0.0
    %930 = vmatpush.msra.mxu0 %v410
    %931 = vmatmul.f32.gmra.mxu0 %v913
    %v932 = vpop.f32.mrf.mxu0
    %v933 = vadd.f32 0.0, %v932
    %934 = vdwg.mxu0
    %v936 = vsel %vm453, %v773, 0
    %938 = vmatpush.msra.mxu0 0.0
    %939 = vmatpush.msra.mxu0 0.0
    %940 = vmatpush.msra.mxu0 0.0
    %941 = vmatpush.msra.mxu0 0.0
    %942 = vmatpush.msra.mxu0 0.0
    %943 = vmatpush.msra.mxu0 0.0
    %944 = vmatpush.msra.mxu0 0.0
    %945 = vmatpush.msra.mxu0 0.0
    %946 = vmatpush.msra.mxu0 0.0
    %947 = vmatpush.msra.mxu0 0.0
    %948 = vmatpush.msra.mxu0 0.0
    %949 = vmatpush.msra.mxu0 0.0
    %950 = vmatpush.msra.mxu0 0.0
    %951 = vmatpush.msra.mxu0 0.0
    %952 = vmatpush.msra.mxu0 0.0
    %953 = vmatpush.msra.mxu0 %v443
    %954 = vmatmul.f32.gmra.mxu0 %v936
    %v955 = vpop.f32.mrf.mxu0
    %v956 = vadd.f32 0.0, %v955
    %957 = vdwg.mxu0
    %959 = vrot.lane.b32.xlu0 %v818, 8
    %v960 = vpop.permute.xlu0 %959
    %963 = vrot.lane.b32.xlu0 %v841, 16
    %v964 = vpop.permute.xlu0 %963
    %967 = vrot.lane.b32.xlu0 %v864, 24
    %v968 = vpop.permute.xlu0 %967
    %v970 = vsel %vm453, %v795, %v960
    %vm971 = vcmask 130048
    %v972 = vsel %vm971, %v970, %v964
    %vm973 = vcmask 195584
    %v974 = vsel %vm973, %v972, %v968
    %976 = vrot.lane.b32.xlu0 %v910, 8
    %v977 = vpop.permute.xlu0 %976
    %980 = vrot.lane.b32.xlu0 %v933, 16
    %v981 = vpop.permute.xlu0 %980
    %984 = vrot.lane.b32.xlu0 %v956, 24
    %v985 = vpop.permute.xlu0 %984
    %v987 = vsel %vm453, %v887, %v977
    %v988 = vsel %vm971, %v987, %v981
    %v989 = vsel %vm973, %v988, %v985
    %v990 = vld [vmem:[%s3] sm:$0xff]
    %v991 = vld [vmem:[%s3 + $0x8] sm:$0xff]
    %v992 = vld [vmem:[%s3 + $0x10] sm:$0xff]
    %v993 = vld [vmem:[%s3 + $0x18] sm:$0xff]
    %v994 = vld [vmem:[%s4] sm:$0x1]
    %v996 = vperm.slane %v994, 0
    %v999 = vsel %vm34, %v974, 0
    %v1002 = vsel %vm34, %v989, 0
    %1004 = vmatpush.msra.mxu0 0.0
    %1005 = vmatpush.msra.mxu0 0.0
    %1006 = vmatpush.msra.mxu0 0.0
    %1007 = vmatpush.msra.mxu0 0.0
    %1008 = vmatpush.msra.mxu0 0.0
    %1009 = vmatpush.msra.mxu0 0.0
    %1010 = vmatpush.msra.mxu0 0.0
    %1011 = vmatpush.msra.mxu0 0.0
    %1012 = vmatpush.msra.mxu0 0.0
    %1013 = vmatpush.msra.mxu0 0.0
    %1014 = vmatpush.msra.mxu0 0.0
    %1015 = vmatpush.msra.mxu0 0.0
    %1016 = vmatpush.msra.mxu0 %v993
    %1017 = vmatpush.msra.mxu0 %v992
    %1018 = vmatpush.msra.mxu0 %v991
    %1019 = vmatpush.msra.mxu0 %v990
    %1020 = vmatmul.f32.gmra.mxu0 %v999
    %v1021 = vpop.f32.mrf.mxu0
    %v1022 = vadd.f32 %v996, %v1021
    %1023 = vmatmul.f32.gmra.mxu0 %v1002
    %v1024 = vpop.f32.mrf.mxu0
    %v1025 = vadd.f32 %v996, %v1024
    %1026 = vdwg.mxu0
    %1027 = vst.msk [vmem:[#allocation2] sm:$0xff] %vm34, %v1022
    %1028 = vst.msk [vmem:[#allocation2 + $0x8] sm:$0xff] %vm34, %v1025
    // Predicated region
    $region26: #{mha_forward.1} parent=1 // pred_check
      _
    $region27: #{mha_forward.1} parent=1 // pred_check_branch
      %1030 = sbr.rel (0) target = $region29
    $region28: #{mha_forward.1} parent=1 // pred_region
      %1032 = vsyncadd [#allocation3], 0
      %s1033 = sshll.u32 [#allocation2], 4
      %s1034 = int_to_ptr.vmem [resolvable:$true] %s1033
      %s1035 = sshll.u32 %s6, 4
      %s1036 = int_to_ptr.hbm [resolvable:$true] %s1035
      %1041 = dma.vmem_to_hbm [thread:$0]  %s1034, 256, %s1036, [#allocation3], 128, 128, 8
    $region29: #{mha_forward.1} parent=1 // pred_fallthru
      _
    // Predicated region
    $region30: #{mha_forward.1} parent=1 // pred_check
      _
    $region31: #{mha_forward.1} parent=1 // pred_check_branch
      %1043 = sbr.rel (0) target = $region33
    $region32: #{mha_forward.1} parent=1 // pred_region
      %1045 = dma.done [#allocation3], 256
    $region33: #{mha_forward.1} parent=1 // pred_fallthru
      _
    %1046 = vsyncpa [#allocation3], 1

</llo_original>
